<compile_context>
chip_gen: v7x
topology: tpu7x:2x2x1
jax: 0.10.0
libtpu: 0.0.40
codegen_flags: <defaults>
</compile_context>

<pallas_src>
import functools

import jax
import jax.numpy as jnp
from jax.experimental import pallas as pl
from jax.experimental.pallas import tpu as pltpu


def _cdiv(a, b):
    return -(-a // b)


def _round_up(x, m):
    return _cdiv(x, m) * m


def residual_ff_kernel(x_ref, w1_ref, b1_ref, w2_ref, b2_ref, o_ref, acc_ref):
    """One (tm, Dp) token tile x one hidden slice of
       out = GELU(x @ w1 + b1) @ w2 + b2 + x, accumulated over hidden slices."""
    h_step = pl.program_id(1)

    @pl.when(h_step == 0)
    def _():
        acc_ref[...] = jnp.zeros_like(acc_ref)

    x = x_ref[...]                                        # (tm, Dp), caller dtype
    # bf16 operands into the MXU, f32 accumulation.
    hid = jnp.dot(x.astype(jnp.bfloat16), w1_ref[...],
                  preferred_element_type=jnp.float32)
    # NOTE: tanh-approx GELU (jax.nn.gelu default). torch.nn.GELU defaults to
    # exact erf; the in-file reference uses the same approximation, so this
    # script is self-consistent.
    # TODO(synk): switch to the erf variant if bit-parity with torch's default
    # GELU is required.
    hid = jax.nn.gelu(hid + b1_ref[...])                  # f32 VPU/EUP epilogue
    acc_ref[...] += jnp.dot(hid.astype(jnp.bfloat16), w2_ref[...],
                            preferred_element_type=jnp.float32)

    @pl.when(h_step == pl.num_programs(1) - 1)
    def _():
        # ResidualAdd semantics: fn(x) + res
        o_ref[...] = (acc_ref[...] + b2_ref[...]
                      + x.astype(jnp.float32)).astype(o_ref.dtype)


@functools.partial(jax.jit, static_argnames=("tm", "th"))
def residual_add_ff(x, w1, b1, w2, b2, *, tm=None, th=512):
    """out = FeedForward(x) + x, fused in a single Pallas kernel.

    x : (B, N, D)   w1: (D, H)   b1: (H,)   w2: (H, D)   b2: (D,)

    NOTE: operands are cast to bf16 before each MXU matmul (f32 accumulation);
    vs a pure-f32 PyTorch FeedForward this introduces ~1e-3-level error.
    """
    B, N, D = x.shape
    H = w1.shape[1]
    M = B * N
    out_dtype = x.dtype

    # ---- generation-aware VMEM / tile provisioning --------------------------
    try:
        phys_vmem = int(getattr(pltpu.get_tpu_info(), "vmem_capacity_bytes",
                                128 << 20))
    except Exception:                      # interpret mode / exotic backends
        phys_vmem = 128 << 20
    vmem_cap = max(phys_vmem - (12 << 20), 32 << 20)   # leave scheduler headroom

    if tm is None:
        # v5e / v6e (128 MiB VMEM) take tm=512; v7x (64 MiB) stays at 256 so
        # x/out tiles + streamed weight slices + the f32 hidden still fit.
        tm = 512 if phys_vmem >= (96 << 20) else 256

    # ---- lane-dense padding targets ------------------------------------------
    Dp = _round_up(D, 128)

    # Hidden dimension is streamed over a reduction grid axis.
    Hp0 = _round_up(H, 128)
    n_h = _cdiv(Hp0, th)
    th_eff = _round_up(_cdiv(Hp0, n_h), 128)
    Hp = n_h * th_eff
    single_h = n_h == 1

    # Token tiling: minimise row padding for ragged M, and always produce >= 2
    # tiles (when possible) so both of v7x's TensorCores get work; the extra
    # grid step is negligible on 1-TC v5e/v6e.
    n_m = max(_cdiv(M, tm), 2 if M >= 16 else 1)
    tm_eff = _round_up(_cdiv(M, n_m), 8)
    Mp = n_m * tm_eff

    # ---- operand preparation (fast path skips all pad/copy HBM traffic) -----
    aligned = (Mp == M) and (Dp == D) and (Hp == H)
    if aligned:
        x2 = x.reshape(M, D)
        w1p = w1.astype(jnp.bfloat16)
        b1p = b1.astype(jnp.float32).reshape(1, H)
        w2p = w2.astype(jnp.bfloat16)
        b2p = b2.astype(jnp.float32).reshape(1, D)
    else:
        # Zero padding is mathematically exact for this fn (padded lanes stay
        # zero through both matmuls, the GELU and the residual add).
        x2 = jnp.zeros((Mp, Dp), out_dtype).at[:M, :D].set(x.reshape(M, D))
        w1p = jnp.zeros((Dp, Hp), jnp.bfloat16).at[:D, :H].set(
            w1.astype(jnp.bfloat16))
        b1p = jnp.zeros((1, Hp), jnp.float32).at[0, :H].set(
            b1.astype(jnp.float32))
        w2p = jnp.zeros((Hp, Dp), jnp.bfloat16).at[:H, :D].set(
            w2.astype(jnp.bfloat16))
        b2p = jnp.zeros((1, Dp), jnp.float32).at[0, :D].set(
            b2.astype(jnp.float32))

    # ---- VMEM budget ---------------------------------------------------------
    itemsize = jnp.dtype(out_dtype).itemsize
    n_wbuf = 1 if single_h else 2
    vmem_bytes = (
        2 * tm_eff * Dp * itemsize              # x tiles (double buffered)
        + 2 * tm_eff * Dp * itemsize            # out tiles (double buffered)
        + n_wbuf * 2 * Dp * th_eff * 2          # bf16 w1/w2 slices
        + n_wbuf * th_eff * 4 + 2 * Dp * 4      # biases
        + tm_eff * Dp * 4                       # f32 accumulator scratch
        + tm_eff * th_eff * 4                   # f32 hidden live values
        + (8 << 20)                             # scheduler / spill headroom
    )
    vmem_limit = int(min(max(vmem_bytes, 32 << 20), vmem_cap))

    # Weights / biases whose block never changes are single-buffered
    # (pl.Buffered(1)); when the hidden axis is streamed (n_h > 1) the weight
    # slices change per step and keep the default double-buffering.
    def _wspec(shape, imap, constant):
        if constant:
            return pl.BlockSpec(shape, imap, pipeline_mode=pl.Buffered(1))
        return pl.BlockSpec(shape, imap)

    in_specs = [
        pl.BlockSpec((tm_eff, Dp), lambda i, h: (i, 0)),                # x tile
        _wspec((Dp, th_eff), lambda i, h: (0, h), constant=single_h),   # w1
        _wspec((1, th_eff), lambda i, h: (0, h), constant=single_h),    # b1
        _wspec((th_eff, Dp), lambda i, h: (h, 0), constant=single_h),   # w2
        _wspec((1, Dp), lambda i, h: (0, 0), constant=True),            # b2
    ]

    call_kwargs = dict(
        out_shape=jax.ShapeDtypeStruct((Mp, Dp), out_dtype),
        grid_spec=pltpu.PrefetchScalarGridSpec(
            num_scalar_prefetch=0,
            grid=(n_m, n_h),
            in_specs=in_specs,
            out_specs=pl.BlockSpec((tm_eff, Dp), lambda i, h: (i, 0)),
            scratch_shapes=[pltpu.VMEM((tm_eff, Dp), jnp.float32)],
        ),
        compiler_params=pltpu.CompilerParams(
            dimension_semantics=("parallel", "arbitrary"),
            vmem_limit_bytes=vmem_limit,
        ),
    )
    if not aligned:
        # The padded x2 buffer is private to this call -> safe to write the
        # result back into it (no extra (Mp, Dp) HBM output allocation).
        call_kwargs["input_output_aliases"] = {0: 0}

    out = pl.pallas_call(residual_ff_kernel, **call_kwargs)(
        x2, w1p, b1p, w2p, b2p)

    if aligned:
        return out.reshape(B, N, D)
    return out[:M, :D].reshape(B, N, D)


def _reference(x, w1, b1, w2, b2):
    """Pure-JAX reference mirroring the kernel's bf16-operand / f32-acc path."""
    B, N, D = x.shape
    xb = x.reshape(-1, D).astype(jnp.bfloat16)
    h = jnp.dot(xb, w1.astype(jnp.bfloat16),
                preferred_element_type=jnp.float32) + b1.astype(jnp.float32)
    h = jax.nn.gelu(h)
    y = jnp.dot(h.astype(jnp.bfloat16), w2.astype(jnp.bfloat16),
                preferred_element_type=jnp.float32) + b2.astype(jnp.float32)
    return (y.reshape(B, N, D) + x.astype(jnp.float32)).astype(x.dtype)


def _run_case(B, N, D, H, key):
    kx, k1, k2, k3, k4 = jax.random.split(key, 5)
    x = jax.random.normal(kx, (B, N, D), dtype=jnp.float32)
    w1 = jax.random.normal(k1, (D, H), dtype=jnp.float32) * 0.05
    b1 = jax.random.normal(k2, (H,), dtype=jnp.float32) * 0.01
    w2 = jax.random.normal(k3, (H, D), dtype=jnp.float32) * 0.05
    b2 = jax.random.normal(k4, (D,), dtype=jnp.float32) * 0.01

    out = jax.block_until_ready(residual_add_ff(x, w1, b1, w2, b2))
    ref = _reference(x, w1, b1, w2, b2)
    assert out.shape == x.shape
    assert jnp.allclose(out, ref, atol=3e-3, rtol=3e-3), (
        f"mismatch vs reference for shape {(B, N, D, H)}: "
        f"max|diff|={float(jnp.max(jnp.abs(out - ref)))}")


if __name__ == "__main__":
    key = jax.random.PRNGKey(0)
    k_small, k_aligned, k_ragged = jax.random.split(key, 3)

    # Small shapes consistent with the module spec: batch=2, seq=8, hidden=32.
    _run_case(2, 8, 32, 64, k_small)
    # 128-aligned shapes: exercises the no-padding fast path and the streamed
    # hidden (reduction) grid axis (H=1024 > th=512 -> 2 hidden steps).
    _run_case(2, 128, 128, 1024, k_aligned)
    # Ragged token count + non-128 D/H: padded path, token tile chosen to
    # minimise row padding (M=800 -> zero dead rows).
    _run_case(4, 200, 96, 192, k_ragged)

    print("KERNEL_OK")
</pallas_src>

<mosaic_0001>
module attributes {stable_mosaic.version = 11 : i64} {
  func.func @residual_ff_kernel(%arg0: i32, %arg1: i32, %arg2: memref<8x128xf32, #tpu.memory_space<vmem>>, %arg3: memref<128x128xbf16, #tpu.memory_space<vmem>>, %arg4: memref<1x128xf32, #tpu.memory_space<vmem>>, %arg5: memref<128x128xbf16, #tpu.memory_space<vmem>>, %arg6: memref<1x128xf32, #tpu.memory_space<vmem>>, %arg7: memref<8x128xf32, #tpu.memory_space<vmem>>, %arg8: memref<8x128xf32, #tpu.memory_space<vmem>>) attributes {dimension_semantics = [#tpu.dimension_semantics<parallel>, #tpu.dimension_semantics<arbitrary>], iteration_bounds = array<i64: 2, 1>, scalar_prefetch = 0 : i64, scratch_operands = 1 : i64, tpu.core_type = #tpu.core_type<tc>, window_params = [{transform_indices = @transform_0, window_bounds = array<i64: 8, 128>}, {pipeline_mode = #tpu.pipeline_mode<synchronous>, transform_indices = @transform_1, window_bounds = array<i64: 128, 128>}, {pipeline_mode = #tpu.pipeline_mode<synchronous>, transform_indices = @transform_2, window_bounds = array<i64: 1, 128>}, {pipeline_mode = #tpu.pipeline_mode<synchronous>, transform_indices = @transform_3, window_bounds = array<i64: 128, 128>}, {pipeline_mode = #tpu.pipeline_mode<synchronous>, transform_indices = @transform_4, window_bounds = array<i64: 1, 128>}, {transform_indices = @transform_5, window_bounds = array<i64: 8, 128>}]} {
    %c0_i32 = arith.constant 0 : i32
    %0 = arith.cmpi eq, %arg1, %c0_i32 : i32
    %1 = arith.extui %0 : i1 to i32
    %c0_i32_0 = arith.constant 0 : i32
    %2 = arith.cmpi ne, %1, %c0_i32_0 : i32
    scf.if %2 {
      %cst_19 = arith.constant 0.000000e+00 : f32
      %32 = vector.broadcast %cst_19 : f32 to vector<8x128xf32>
      %c0_20 = arith.constant 0 : index
      %c0_21 = arith.constant 0 : index
      %33 = vector.load %arg8[%c0_20, %c0_21] : memref<8x128xf32, #tpu.memory_space<vmem>>, vector<8x128xf32>
      tpu.vector_store %arg8[%c0_20, %c0_21], %32 {strides = array<i32>} : memref<8x128xf32, #tpu.memory_space<vmem>>, vector<8x128xf32>,
    } else {
    }
    %c0 = arith.constant 0 : index
    %c0_1 = arith.constant 0 : index
    %3 = vector.load %arg2[%c0, %c0_1] : memref<8x128xf32, #tpu.memory_space<vmem>>, vector<8x128xf32>
    %4 = arith.truncf %3 : vector<8x128xf32> to vector<8x128xbf16>
    %c0_2 = arith.constant 0 : index
    %c0_3 = arith.constant 0 : index
    %5 = vector.load %arg3[%c0_2, %c0_3] : memref<128x128xbf16, #tpu.memory_space<vmem>>, vector<128x128xbf16>
    %cst = arith.constant dense<0.000000e+00> : vector<8x128xf32>
    %6 = tpu.matmul %4, %5, %cst {dimension_numbers = #tpu.dot_dimension_numbers<[1], [0], [0], [1], [0, 0, 1, 1], [], []>} : vector<8x128xbf16>, vector<128x128xbf16>, vector<8x128xf32> -> vector<8x128xf32>
    %c0_4 = arith.constant 0 : index
    %c0_5 = arith.constant 0 : index
    %7 = vector.load %arg4[%c0_4, %c0_5] : memref<1x128xf32, #tpu.memory_space<vmem>>, vector<1x128xf32>
    %8 = vector.broadcast %7 : vector<1x128xf32> to vector<8x128xf32>
    %9 = arith.addf %6, %8 : vector<8x128xf32>
    %10 = arith.mulf %9, %9 : vector<8x128xf32>
    %11 = arith.mulf %9, %10 : vector<8x128xf32>
    %cst_6 = arith.constant 4.471500e-02 : f32
    %12 = vector.broadcast %cst_6 : f32 to vector<8x128xf32>
    %13 = arith.mulf %12, %11 : vector<8x128xf32>
    %14 = arith.addf %9, %13 : vector<8x128xf32>
    %cst_7 = arith.constant 0.797884583 : f32
    %15 = vector.broadcast %cst_7 : f32 to vector<8x128xf32>
    %16 = arith.mulf %15, %14 : vector<8x128xf32>
    %17 = math.tanh %16 : vector<8x128xf32>
    %cst_8 = arith.constant 1.000000e+00 : f32
    %18 = vector.broadcast %cst_8 : f32 to vector<8x128xf32>
    %19 = arith.addf %18, %17 : vector<8x128xf32>
    %cst_9 = arith.constant 5.000000e-01 : f32
    %20 = vector.broadcast %cst_9 : f32 to vector<8x128xf32>
    %21 = arith.mulf %20, %19 : vector<8x128xf32>
    %22 = arith.mulf %9, %21 : vector<8x128xf32>
    %c0_10 = arith.constant 0 : index
    %c0_11 = arith.constant 0 : index
    %23 = vector.load %arg8[%c0_10, %c0_11] : memref<8x128xf32, #tpu.memory_space<vmem>>, vector<8x128xf32>
    %24 = arith.truncf %22 : vector<8x128xf32> to vector<8x128xbf16>
    %c0_12 = arith.constant 0 : index
    %c0_13 = arith.constant 0 : index
    %25 = vector.load %arg5[%c0_12, %c0_13] : memref<128x128xbf16, #tpu.memory_space<vmem>>, vector<128x128xbf16>
    %cst_14 = arith.constant dense<0.000000e+00> : vector<8x128xf32>
    %26 = tpu.matmul %24, %25, %cst_14 {dimension_numbers = #tpu.dot_dimension_numbers<[1], [0], [0], [1], [0, 0, 1, 1], [], []>} : vector<8x128xbf16>, vector<128x128xbf16>, vector<8x128xf32> -> vector<8x128xf32>
    %27 = arith.addf %23, %26 : vector<8x128xf32>
    %c0_15 = arith.constant 0 : index
    %c0_16 = arith.constant 0 : index
    %28 = vector.load %arg8[%c0_15, %c0_16] : memref<8x128xf32, #tpu.memory_space<vmem>>, vector<8x128xf32>
    tpu.vector_store %arg8[%c0_15, %c0_16], %27 {strides = array<i32>} : memref<8x128xf32, #tpu.memory_space<vmem>>, vector<8x128xf32>,
    %c0_i32_17 = arith.constant 0 : i32
    %29 = arith.cmpi eq, %arg1, %c0_i32_17 : i32
    %30 = arith.extui %29 : i1 to i32
    %c0_i32_18 = arith.constant 0 : i32
    %31 = arith.cmpi ne, %30, %c0_i32_18 : i32
    scf.if %31 {
      %c0_19 = arith.constant 0 : index
      %c0_20 = arith.constant 0 : index
      %32 = vector.load %arg8[%c0_19, %c0_20] : memref<8x128xf32, #tpu.memory_space<vmem>>, vector<8x128xf32>
      %c0_21 = arith.constant 0 : index
      %c0_22 = arith.constant 0 : index
      %33 = vector.load %arg6[%c0_21, %c0_22] : memref<1x128xf32, #tpu.memory_space<vmem>>, vector<1x128xf32>
      %34 = vector.broadcast %33 : vector<1x128xf32> to vector<8x128xf32>
      %35 = arith.addf %32, %34 : vector<8x128xf32>
      %36 = arith.addf %35, %3 : vector<8x128xf32>
      %c0_23 = arith.constant 0 : index
      %c0_24 = arith.constant 0 : index
      %37 = vector.load %arg7[%c0_23, %c0_24] : memref<8x128xf32, #tpu.memory_space<vmem>>, vector<8x128xf32>
      tpu.vector_store %arg7[%c0_23, %c0_24], %36 {strides = array<i32>} : memref<8x128xf32, #tpu.memory_space<vmem>>, vector<8x128xf32>,
    } else {
    }
    return
  }
  func.func @transform_0(%arg0: i32, %arg1: i32) -> (i32, i32) {
    %c0_i32 = arith.constant 0 : i32
    %c0_i32_0 = arith.constant 0 : i32
    return %arg0, %c0_i32 : i32, i32
  }
  func.func @transform_1(%arg0: i32, %arg1: i32) -> (i32, i32) {
    %c0_i32 = arith.constant 0 : i32
    %c0_i32_0 = arith.constant 0 : i32
    return %c0_i32, %arg1 : i32, i32
  }
  func.func @transform_2(%arg0: i32, %arg1: i32) -> (i32, i32) {
    %c0_i32 = arith.constant 0 : i32
    %c0_i32_0 = arith.constant 0 : i32
    return %c0_i32, %arg1 : i32, i32
  }
  func.func @transform_3(%arg0: i32, %arg1: i32) -> (i32, i32) {
    %c0_i32 = arith.constant 0 : i32
    %c0_i32_0 = arith.constant 0 : i32
    return %arg1, %c0_i32 : i32, i32
  }
  func.func @transform_4(%arg0: i32, %arg1: i32) -> (i32, i32) {
    %c0_i32 = arith.constant 0 : i32
    %c0_i32_0 = arith.constant 0 : i32
    %c0_i32_1 = arith.constant 0 : i32
    return %c0_i32, %c0_i32_0 : i32, i32
  }
  func.func @transform_5(%arg0: i32, %arg1: i32) -> (i32, i32) {
    %c0_i32 = arith.constant 0 : i32
    %c0_i32_0 = arith.constant 0 : i32
    return %arg0, %c0_i32 : i32, i32
  }
}

</mosaic_0001>

<llo_original>
// kernel: residual_add_ff.1
$region0: #{residual_add_ff.1}
  #allocation0 [shape = 'u32[]', space=smem, size = 0x4, offset = 0x4, fixed_abs, tag = 'smem constant byte address 0x4 - core index']
  #allocation1 [shape = 'u32[144,128]{1,0:T(1,128)}', space=vmem, size = 0x12000, scoped, tag = 'internal scratch']
  #allocation2 [shape = 'f32[8,128]{1,0:T(8,128)}', space=vmem, size = 0x1000, scoped, tag = 'scratch operand']
  %s0 = inlined_call_operand.vmem [shape: f32[16,128], index: 0, kind: input, shape index: {}, may-alias: {0,5}]
  %s1 = inlined_call_operand.vmem [shape: bf16[128,128], index: 1, kind: input, shape index: {}]
  %s2 = inlined_call_operand.vmem [shape: f32[1,128], index: 2, kind: input, shape index: {}]
  %s3 = inlined_call_operand.vmem [shape: bf16[128,128], index: 3, kind: input, shape index: {}]
  %s4 = inlined_call_operand.vmem [shape: f32[1,128], index: 4, kind: input, shape index: {}]
  %s5 = inlined_call_operand.vmem [shape: f32[16,128], index: 5, kind: output, shape index: {}, may-alias: {0,5}]
  %s6 = sld [smem:[#allocation0]]
  $region61: #{residual_add_ff.1} parent=0
    _
  %s8 = ssub.s32 1, %s6
  %s9 = scalar_select 0, %s8, %s6
  loop: start=0, step=1, limit=4
  $region2: #{residual_add_ff.1} parent=0 // loop_pre_header
    _
  $region3: #{residual_add_ff.1} parent=0 // loop_header
    %s11 = sphi 0, %s15
    %p12 = scmp.ge.s32.totalorder %s11, 4
    %s18 = sphi 0, %s30
    %s19 = sphi 0, %s26
    %s20 = sphi 0, %s18
    %s21 = sphi 0, %s19
    %s22 = sphi 0, %s20
    %s23 = sphi 0, %s21
    %s33 = sphi 0, %s35
    %s36 = sphi 0, %s33
    %s37 = sphi 0, %s36
    %s53 = sphi 0, %s37
    %s59 = sphi 0, %s61
    %s62 = sphi 0, %s59
    %s63 = sphi 0, %s62
    %s79 = sphi 0, %s63
    %s85 = sphi 0, %s87
    %s88 = sphi 0, %s85
    %s89 = sphi 0, %s88
    %s105 = sphi 0, %s89
    %s111 = sphi 0, %s113
    %s114 = sphi 0, %s111
    %s115 = sphi 0, %s114
    %s131 = sphi 0, %s115
    %s135 = sphi 0, %s135
    %s137 = sphi 0, %s135
    %s138 = sphi 0, %s137
    %s152 = sphi 0, %s138
    %s158 = sphi 0, %s160
    %s161 = sphi 0, %s158
    %s162 = sphi 0, %s161
    %s178 = sphi 0, %s162
  $region4: #{residual_add_ff.1} parent=0 // loop_header_branch
    %14 = sbr.rel (%p12) target = $region8
  $region5: #{residual_add_ff.1} parent=0 // loop_body
    %s16 = ssub.s32 %s11, 1
    %s17 = ssub.s32 %s11, 2
    %s24 = sadd.s32 1, %s19
    %p25 = scmp.ge.s32.totalorder %s24, 1
    %s26 = scalar_select %p25, 0, %s24
    %s27 = sadd.s32 1, %s18
    %s28 = scalar_select %p25, %s27, %s18
    %p29 = scmp.ge.s32.totalorder %s28, 2
    %s30 = scalar_select %p29, 0, %s28
    %s31 = ssub.s32 %s18, %s30
    %p32 = scmp.eq.s32.totalorder %s31, 0
    %s34 = sadd.s32 %s33, 1
    %s35 = scalar_select %p32, %s33, %s34
    %p38 = pneg %p32
    %p39 = scmp.eq.s32.totalorder %s11, 1
    %p40 = por %p38, %p39
    %p41 = scmp.ne.s32.totalorder %s33, %s36
    %p42 = scmp.eq.s32.totalorder %s11, 0
    %p43 = por %p41, %p42
    %p44 = scmp.ne.s32.totalorder %s33, %s36
    %p45 = scmp.eq.s32.totalorder %s16, 1
    %p46 = por %p44, %p45
    %p47 = scmp.ne.s32.totalorder %s36, %s37
    %p48 = scmp.eq.s32.totalorder %s16, 0
    %p49 = por %p47, %p48
    %p50 = scmp.ne.s32.totalorder %s36, %s37
    %p51 = scmp.eq.s32.totalorder %s17, 1
    %p52 = por %p50, %p51
    %p54 = scmp.ne.s32.totalorder %s37, %s53
    %p55 = scmp.eq.s32.totalorder %s17, 0
    %p56 = por %p54, %p55
    %s57 = ssub.s32 %s19, %s26
    %p58 = scmp.eq.s32.totalorder %s57, 0
    %s60 = sadd.s32 %s59, 1
    %s61 = scalar_select %p58, %s59, %s60
    %p64 = pneg %p58
    %p65 = scmp.eq.s32.totalorder %s11, 1
    %p66 = por %p64, %p65
    %p67 = scmp.ne.s32.totalorder %s59, %s62
    %p68 = scmp.eq.s32.totalorder %s11, 0
    %p69 = por %p67, %p68
    %p70 = scmp.ne.s32.totalorder %s59, %s62
    %p71 = scmp.eq.s32.totalorder %s16, 1
    %p72 = por %p70, %p71
    %p73 = scmp.ne.s32.totalorder %s62, %s63
    %p74 = scmp.eq.s32.totalorder %s16, 0
    %p75 = por %p73, %p74
    %p76 = scmp.ne.s32.totalorder %s62, %s63
    %p77 = scmp.eq.s32.totalorder %s17, 1
    %p78 = por %p76, %p77
    %p80 = scmp.ne.s32.totalorder %s63, %s79
    %p81 = scmp.eq.s32.totalorder %s17, 0
    %p82 = por %p80, %p81
    %s83 = ssub.s32 %s19, %s26
    %p84 = scmp.eq.s32.totalorder %s83, 0
    %s86 = sadd.s32 %s85, 1
    %s87 = scalar_select %p84, %s85, %s86
    %p90 = pneg %p84
    %p91 = scmp.eq.s32.totalorder %s11, 1
    %p92 = por %p90, %p91
    %p93 = scmp.ne.s32.totalorder %s85, %s88
    %p94 = scmp.eq.s32.totalorder %s11, 0
    %p95 = por %p93, %p94
    %p96 = scmp.ne.s32.totalorder %s85, %s88
    %p97 = scmp.eq.s32.totalorder %s16, 1
    %p98 = por %p96, %p97
    %p99 = scmp.ne.s32.totalorder %s88, %s89
    %p100 = scmp.eq.s32.totalorder %s16, 0
    %p101 = por %p99, %p100
    %p102 = scmp.ne.s32.totalorder %s88, %s89
    %p103 = scmp.eq.s32.totalorder %s17, 1
    %p104 = por %p102, %p103
    %p106 = scmp.ne.s32.totalorder %s89, %s105
    %p107 = scmp.eq.s32.totalorder %s17, 0
    %p108 = por %p106, %p107
    %s109 = ssub.s32 %s19, %s26
    %p110 = scmp.eq.s32.totalorder %s109, 0
    %s112 = sadd.s32 %s111, 1
    %s113 = scalar_select %p110, %s111, %s112
    %p116 = pneg %p110
    %p117 = scmp.eq.s32.totalorder %s11, 1
    %p118 = por %p116, %p117
    %p119 = scmp.ne.s32.totalorder %s111, %s114
    %p120 = scmp.eq.s32.totalorder %s11, 0
    %p121 = por %p119, %p120
    %p122 = scmp.ne.s32.totalorder %s111, %s114
    %p123 = scmp.eq.s32.totalorder %s16, 1
    %p124 = por %p122, %p123
    %p125 = scmp.ne.s32.totalorder %s114, %s115
    %p126 = scmp.eq.s32.totalorder %s16, 0
    %p127 = por %p125, %p126
    %p128 = scmp.ne.s32.totalorder %s114, %s115
    %p129 = scmp.eq.s32.totalorder %s17, 1
    %p130 = por %p128, %p129
    %p132 = scmp.ne.s32.totalorder %s115, %s131
    %p133 = scmp.eq.s32.totalorder %s17, 0
    %p134 = por %p132, %p133
    %s136 = sadd.s32 %s135, 1
    %p139 = scmp.eq.s32.totalorder %s11, 1
    %p140 = scmp.ne.s32.totalorder %s135, %s137
    %p141 = scmp.eq.s32.totalorder %s11, 0
    %p142 = por %p140, %p141
    %p143 = scmp.ne.s32.totalorder %s135, %s137
    %p144 = scmp.eq.s32.totalorder %s16, 1
    %p145 = por %p143, %p144
    %p146 = scmp.ne.s32.totalorder %s137, %s138
    %p147 = scmp.eq.s32.totalorder %s16, 0
    %p148 = por %p146, %p147
    %p149 = scmp.ne.s32.totalorder %s137, %s138
    %p150 = scmp.eq.s32.totalorder %s17, 1
    %p151 = por %p149, %p150
    %p153 = scmp.ne.s32.totalorder %s138, %s152
    %p154 = scmp.eq.s32.totalorder %s17, 0
    %p155 = por %p153, %p154
    %s156 = ssub.s32 %s18, %s30
    %p157 = scmp.eq.s32.totalorder %s156, 0
    %s159 = sadd.s32 %s158, 1
    %s160 = scalar_select %p157, %s158, %s159
    %p163 = pneg %p157
    %p164 = scmp.eq.s32.totalorder %s11, 1
    %p165 = por %p163, %p164
    %p166 = scmp.ne.s32.totalorder %s158, %s161
    %p167 = scmp.eq.s32.totalorder %s11, 0
    %p168 = por %p166, %p167
    %p169 = scmp.ne.s32.totalorder %s158, %s161
    %p170 = scmp.eq.s32.totalorder %s16, 1
    %p171 = por %p169, %p170
    %p172 = scmp.ne.s32.totalorder %s161, %s162
    %p173 = scmp.eq.s32.totalorder %s16, 0
    %p174 = por %p172, %p173
    %p175 = scmp.ne.s32.totalorder %s161, %s162
    %p176 = scmp.eq.s32.totalorder %s17, 1
    %p177 = por %p175, %p176
    %p179 = scmp.ne.s32.totalorder %s162, %s178
    %p180 = scmp.eq.s32.totalorder %s17, 0
    %p181 = por %p179, %p180
    %p182 = scmp.le.s32.totalorder 1, %s11
    %p183 = scmp.lt.s32.totalorder %s11, 3
    %p184 = pnand %p182, %p183
    %p185 = pneg %p184
    // Predicated region
    $region9: #{residual_add_ff.1} parent=5 // pred_check
      _
    $region10: #{residual_add_ff.1} parent=5 // pred_check_branch
      %187 = sbr.rel (%p184) target = $region12
    $region11: #{residual_add_ff.1} parent=5 // pred_region
      %s188 = ssub.s32 %s11, 1
      // Predicated region
      $region13: #{residual_add_ff.1} parent=11 // pred_check
        %p189 = pneg %p75
      $region14: #{residual_add_ff.1} parent=11 // pred_check_branch
        %191 = sbr.rel (%p189) target = $region16
      $region15: #{residual_add_ff.1} parent=11 // pred_region
        %p192 = scmp.lt.s32.totalorder %s21, 0
        %s193 = scalar_select %p192, %s21, 0
        %s194 = smul.addr %s193, 4
        %s195 = scalar_lea.vmem %s1, %s194
      $region16: #{residual_add_ff.1} parent=11 // pred_fallthru
        _
      // Predicated region
      $region17: #{residual_add_ff.1} parent=11 // pred_check
        %p196 = pneg %p101
      $region18: #{residual_add_ff.1} parent=11 // pred_check_branch
        %198 = sbr.rel (%p196) target = $region20
      $region19: #{residual_add_ff.1} parent=11 // pred_region
        %p199 = scmp.lt.s32.totalorder %s21, 0
        %s200 = scalar_select %p199, %s21, 0
        %s201 = scalar_lea.vmem %s2, %s200
      $region20: #{residual_add_ff.1} parent=11 // pred_fallthru
        _
      // Predicated region
      $region21: #{residual_add_ff.1} parent=11 // pred_check
        %p202 = pneg %p127
      $region22: #{residual_add_ff.1} parent=11 // pred_check_branch
        %204 = sbr.rel (%p202) target = $region24
      $region23: #{residual_add_ff.1} parent=11 // pred_region
        %s205 = smul.u32 16, %s21
        %p206 = scmp.lt.s32.totalorder %s205, 15
        %s207 = scalar_select %p206, %s205, 15
        %s208 = smul.addr %s207, 4
        %s209 = scalar_lea.vmem %s3, %s208
        %s210 = smul.u32 16, %s21
      $region24: #{residual_add_ff.1} parent=11 // pred_fallthru
        _
      // Predicated region
      $region25: #{residual_add_ff.1} parent=11 // pred_check
        %p211 = pneg %p148
      $region26: #{residual_add_ff.1} parent=11 // pred_check_branch
        %213 = sbr.rel (%p211) target = $region28
      $region27: #{residual_add_ff.1} parent=11 // pred_region
        _
      $region28: #{residual_add_ff.1} parent=11 // pred_fallthru
        _
    $region12: #{residual_add_ff.1} parent=5 // pred_fallthru
      _
    %p214 = scmp.lt.s32.totalorder %s11, 2
    // Predicated region
    $region29: #{residual_add_ff.1} parent=5 // pred_check
      %p215 = pneg %p214
    $region30: #{residual_add_ff.1} parent=5 // pred_check_branch
      %217 = sbr.rel (%p215) target = $region32
    $region31: #{residual_add_ff.1} parent=5 // pred_region
      // Predicated region
      $region33: #{residual_add_ff.1} parent=31 // pred_check
        %p218 = pneg %p43
      $region34: #{residual_add_ff.1} parent=31 // pred_check_branch
        %220 = sbr.rel (%p218) target = $region36
      $region35: #{residual_add_ff.1} parent=31 // pred_region
        %p221 = scmp.lt.s32.totalorder %s18, 1
        %s222 = scalar_select %p221, %s18, 1
        %s223 = smul.addr %s222, 8
        %s224 = scalar_lea.vmem %s0, %s223
      $region36: #{residual_add_ff.1} parent=31 // pred_fallthru
        _
    $region32: #{residual_add_ff.1} parent=5 // pred_fallthru
      _
    %p225 = scmp.le.s32.totalorder 1, %s11
    %p226 = scmp.lt.s32.totalorder %s11, 3
    %p227 = pnand %p225, %p226
    %p228 = pneg %p227
    // Predicated region
    $region37: #{residual_add_ff.1} parent=5 // pred_check
      _
    $region38: #{residual_add_ff.1} parent=5 // pred_check_branch
      %230 = sbr.rel (%p227) target = $region40
    $region39: #{residual_add_ff.1} parent=5 // pred_region
      %s231 = ssub.s32 %s11, 1
      %p232 = scmp.lt.s32.totalorder %s20, 1
      %s233 = scalar_select %p232, %s20, 1
      %s234 = smul.addr %s233, 8
      %s235 = scalar_lea.vmem %s0, %s234
      %p236 = pneg %p49
      %p237 = pneg %p46
      %p238 = scmp.lt.s32.totalorder %s21, 0
      %s239 = scalar_select %p238, %s21, 0
      %s240 = smul.addr %s239, 4
      %s241 = scalar_lea.vmem %s1, %s240
      %p242 = pneg %p75
      %p243 = pneg %p72
      %p244 = scmp.lt.s32.totalorder %s21, 0
      %s245 = scalar_select %p244, %s21, 0
      %s246 = scalar_lea.vmem %s2, %s245
      %p247 = pneg %p101
      %p248 = pneg %p98
      %s249 = smul.u32 16, %s21
      %p250 = scmp.lt.s32.totalorder %s249, 15
      %s251 = scalar_select %p250, %s249, 15
      %s252 = smul.addr %s251, 4
      %s253 = scalar_lea.vmem %s3, %s252
      %p254 = pneg %p127
      %p255 = pneg %p124
      %p256 = pneg %p148
      %p257 = pneg %p145
      %p258 = pneg %p174
      %p259 = pneg %p171
      %p260 = scmp.lt.s32.totalorder %s20, 1
      %s261 = scalar_select %p260, %s20, 1
      %s262 = smul.addr %s261, 8
      %s263 = scalar_lea.vmem %s5, %s262
      %p264 = scmp.lt.s32.totalorder %s20, 1
      %s265 = scalar_select %p264, %s20, 1
      %s266 = smul.addr %s265, 8
      %s267 = scalar_lea.vmem %s0, %s266
      %p268 = scmp.lt.s32.totalorder %s21, 0
      %s269 = scalar_select %p268, %s21, 0
      %s270 = smul.addr %s269, 4
      %s271 = scalar_lea.vmem %s1, %s270
      %p272 = scmp.lt.s32.totalorder %s21, 0
      %s273 = scalar_select %p272, %s21, 0
      %s274 = scalar_lea.vmem %s2, %s273
      %s275 = smul.u32 16, %s21
      %p276 = scmp.lt.s32.totalorder %s275, 15
      %s277 = scalar_select %p276, %s275, 15
      %s278 = smul.addr %s277, 4
      %s279 = scalar_lea.vmem %s3, %s278
      %s280 = smul.u32 16, %s21
      %p281 = scmp.lt.s32.totalorder %s20, 1
      %s282 = scalar_select %p281, %s20, 1
      %s283 = smul.addr %s282, 8
      %s284 = scalar_lea.vmem %s5, %s283
      %p286 = scmp.eq.s32.totalorder %s21, 0
      // Predicated region
      $region41: #{residual_add_ff.1} parent=39 // pred_check
        %p287 = pneg %p286
      $region42: #{residual_add_ff.1} parent=39 // pred_check_branch
        %289 = sbr.rel (%p287) target = $region44
      $region43: #{residual_add_ff.1} parent=39 // pred_region
        %290 = vst [vmem:[#allocation2] sm:$0xff] 0.0
      $region44: #{residual_add_ff.1} parent=39 // pred_fallthru
        _
      %v291 = vld [vmem:[%s267] sm:$0xff]
      %v292 = vpack.c.bf16 %v291, %v291
      %v293 = vld [vmem:[%s271] sm:$0xf]
      %v294 = vld [vmem:[%s271 + $0x4] sm:$0xf]
      %v295 = vld [vmem:[%s271 + $0x8] sm:$0xf]
      %v296 = vld [vmem:[%s271 + $0xc] sm:$0xf]
      %v297 = vld [vmem:[%s271 + $0x10] sm:$0xf]
      %v298 = vld [vmem:[%s271 + $0x14] sm:$0xf]
      %v299 = vld [vmem:[%s271 + $0x18] sm:$0xf]
      %v300 = vld [vmem:[%s271 + $0x1c] sm:$0xf]
      %v301 = vld [vmem:[%s271 + $0x20] sm:$0xf]
      %v302 = vld [vmem:[%s271 + $0x24] sm:$0xf]
      %v303 = vld [vmem:[%s271 + $0x28] sm:$0xf]
      %v304 = vld [vmem:[%s271 + $0x2c] sm:$0xf]
      %v305 = vld [vmem:[%s271 + $0x30] sm:$0xf]
      %v306 = vld [vmem:[%s271 + $0x34] sm:$0xf]
      %v307 = vld [vmem:[%s271 + $0x38] sm:$0xf]
      %v308 = vld [vmem:[%s271 + $0x3c] sm:$0xf]
      %v309 = vld [vmem:[%s274] sm:$0x1]
      %v311 = vlaneseq
      %v312 = vshrl.u32 %v311, 7
      %v313 = vsub.s32 0, %v312
      %v314 = vrot.slane %v309, %v313
      %v332 = vunpack.c.l.b16 %v293
      %v333 = vunpack.c.l.b16 %v294
      %v334 = vunpack.c.l.b16 %v295
      %v335 = vunpack.c.l.b16 %v296
      %v336 = vunpack.c.l.b16 %v297
      %v337 = vunpack.c.l.b16 %v298
      %v338 = vunpack.c.l.b16 %v299
      %v339 = vunpack.c.l.b16 %v300
      %v340 = vunpack.c.l.b16 %v301
      %v341 = vunpack.c.l.b16 %v302
      %v342 = vunpack.c.l.b16 %v303
      %v343 = vunpack.c.l.b16 %v304
      %v344 = vunpack.c.l.b16 %v305
      %v345 = vunpack.c.l.b16 %v306
      %v346 = vunpack.c.l.b16 %v307
      %v347 = vunpack.c.l.b16 %v308
      %v348 = vpack.c.b16 %v333, %v332
      %v349 = vpack.c.b16 %v335, %v334
      %v350 = vpack.c.b16 %v337, %v336
      %v351 = vpack.c.b16 %v339, %v338
      %v352 = vpack.c.b16 %v341, %v340
      %v353 = vpack.c.b16 %v343, %v342
      %v354 = vpack.c.b16 %v345, %v344
      %v355 = vpack.c.b16 %v347, %v346
      %364 = vmatprep.subr.bf16.mxu0 0
      %365 = vmatpush1.bf16.msra.mxu0 %v348
      %366 = vmatprep.subr.bf16.mxu0 0
      %367 = vmatpush1.bf16.msra.mxu0 %v349
      %368 = vmatprep.subr.bf16.mxu0 0
      %369 = vmatpush1.bf16.msra.mxu0 %v350
      %370 = vmatprep.subr.bf16.mxu0 0
      %371 = vmatpush1.bf16.msra.mxu0 %v351
      %372 = vmatprep.subr.bf16.mxu0 0
      %373 = vmatpush1.bf16.msra.mxu0 %v352
      %374 = vmatprep.subr.bf16.mxu0 0
      %375 = vmatpush1.bf16.msra.mxu0 %v353
      %376 = vmatprep.subr.bf16.mxu0 0
      %377 = vmatpush1.bf16.msra.mxu0 %v354
      %378 = vmatprep.subr.bf16.mxu0 0
      %379 = vmatpush1.bf16.msra.mxu0 %v355
      %380 = vmatprep.subr.bf16.mxu0 0
      %381 = vmatpush1.bf16.msra.mxu0 0
      %382 = vmatprep.subr.bf16.mxu0 0
      %383 = vmatpush1.bf16.msra.mxu0 0
      %384 = vmatprep.subr.bf16.mxu0 0
      %385 = vmatpush1.bf16.msra.mxu0 0
      %386 = vmatprep.subr.bf16.mxu0 0
      %387 = vmatpush1.bf16.msra.mxu0 0
      %388 = vmatprep.subr.bf16.mxu0 0
      %389 = vmatpush1.bf16.msra.mxu0 0
      %390 = vmatprep.subr.bf16.mxu0 0
      %391 = vmatpush1.bf16.msra.mxu0 0
      %392 = vmatprep.subr.bf16.mxu0 0
      %393 = vmatpush1.bf16.msra.mxu0 0
      %394 = vmatprep.subr.bf16.mxu0 0
      %395 = vmatpush1.bf16.msra.mxu0 0
      %396 = vmatprep.mubr.bf16.mxu0 0
      %397 = vmatmul.mubr.bf16.gmra.mrb[0].mxu0 %v292
      %v398 = vpop.f32.mrb[0].mxu0
      %v399 = vadd.f32 %v314, %v398
      %v400 = vpop.f32.mrb[0].mxu0
      %v401 = vpop.f32.mrb[0].mxu0
      %v402 = vpop.f32.mrb[0].mxu0
      %403 = vdwg.mxu0
      %v404 = vmul.f32 %v399, %v399
      %v405 = vmul.f32 %v399, %v404
      %v406 = vmul.f32 %v405, 0.044715
      %v407 = vadd.f32 %v399, %v406
      %v408 = vmul.f32 %v407, 0.7978846
      %v409 = vtanh.pop %v408
      %v410 = vadd.f32 %v409, 1.0
      %v411 = vmul.f32 %v410, 0.5
      %v412 = vmul.f32 %v399, %v411
      %v413 = vld [vmem:[#allocation2] sm:$0xff]
      %v414 = vpack.c.bf16 %v412, %v412
      %v415 = vld [vmem:[%s279] sm:$0xf]
      %v416 = vld [vmem:[%s279 + $0x4] sm:$0xf]
      %v417 = vld [vmem:[%s279 + $0x8] sm:$0xf]
      %v418 = vld [vmem:[%s279 + $0xc] sm:$0xf]
      %v419 = vld [vmem:[%s279 + $0x10] sm:$0xf]
      %v420 = vld [vmem:[%s279 + $0x14] sm:$0xf]
      %v421 = vld [vmem:[%s279 + $0x18] sm:$0xf]
      %v422 = vld [vmem:[%s279 + $0x1c] sm:$0xf]
      %v423 = vld [vmem:[%s279 + $0x20] sm:$0xf]
      %v424 = vld [vmem:[%s279 + $0x24] sm:$0xf]
      %v425 = vld [vmem:[%s279 + $0x28] sm:$0xf]
      %v426 = vld [vmem:[%s279 + $0x2c] sm:$0xf]
      %v427 = vld [vmem:[%s279 + $0x30] sm:$0xf]
      %v428 = vld [vmem:[%s279 + $0x34] sm:$0xf]
      %v429 = vld [vmem:[%s279 + $0x38] sm:$0xf]
      %v430 = vld [vmem:[%s279 + $0x3c] sm:$0xf]
      %v447 = vunpack.c.l.b16 %v415
      %v448 = vunpack.c.l.b16 %v416
      %v449 = vunpack.c.l.b16 %v417
      %v450 = vunpack.c.l.b16 %v418
      %v451 = vunpack.c.l.b16 %v419
      %v452 = vunpack.c.l.b16 %v420
      %v453 = vunpack.c.l.b16 %v421
      %v454 = vunpack.c.l.b16 %v422
      %v455 = vunpack.c.l.b16 %v423
      %v456 = vunpack.c.l.b16 %v424
      %v457 = vunpack.c.l.b16 %v425
      %v458 = vunpack.c.l.b16 %v426
      %v459 = vunpack.c.l.b16 %v427
      %v460 = vunpack.c.l.b16 %v428
      %v461 = vunpack.c.l.b16 %v429
      %v462 = vunpack.c.l.b16 %v430
      %v463 = vpack.c.b16 %v448, %v447
      %v464 = vpack.c.b16 %v450, %v449
      %v465 = vpack.c.b16 %v452, %v451
      %v466 = vpack.c.b16 %v454, %v453
      %v467 = vpack.c.b16 %v456, %v455
      %v468 = vpack.c.b16 %v458, %v457
      %v469 = vpack.c.b16 %v460, %v459
      %v470 = vpack.c.b16 %v462, %v461
      %479 = vmatprep.subr.bf16.mxu0 0
      %480 = vmatpush1.bf16.msra.mxu0 %v463
      %481 = vmatprep.subr.bf16.mxu0 0
      %482 = vmatpush1.bf16.msra.mxu0 %v464
      %483 = vmatprep.subr.bf16.mxu0 0
      %484 = vmatpush1.bf16.msra.mxu0 %v465
      %485 = vmatprep.subr.bf16.mxu0 0
      %486 = vmatpush1.bf16.msra.mxu0 %v466
      %487 = vmatprep.subr.bf16.mxu0 0
      %488 = vmatpush1.bf16.msra.mxu0 %v467
      %489 = vmatprep.subr.bf16.mxu0 0
      %490 = vmatpush1.bf16.msra.mxu0 %v468
      %491 = vmatprep.subr.bf16.mxu0 0
      %492 = vmatpush1.bf16.msra.mxu0 %v469
      %493 = vmatprep.subr.bf16.mxu0 0
      %494 = vmatpush1.bf16.msra.mxu0 %v470
      %495 = vmatprep.subr.bf16.mxu0 0
      %496 = vmatpush1.bf16.msra.mxu0 0
      %497 = vmatprep.subr.bf16.mxu0 0
      %498 = vmatpush1.bf16.msra.mxu0 0
      %499 = vmatprep.subr.bf16.mxu0 0
      %500 = vmatpush1.bf16.msra.mxu0 0
      %501 = vmatprep.subr.bf16.mxu0 0
      %502 = vmatpush1.bf16.msra.mxu0 0
      %503 = vmatprep.subr.bf16.mxu0 0
      %504 = vmatpush1.bf16.msra.mxu0 0
      %505 = vmatprep.subr.bf16.mxu0 0
      %506 = vmatpush1.bf16.msra.mxu0 0
      %507 = vmatprep.subr.bf16.mxu0 0
      %508 = vmatpush1.bf16.msra.mxu0 0
      %509 = vmatprep.subr.bf16.mxu0 0
      %510 = vmatpush1.bf16.msra.mxu0 0
      %511 = vmatprep.mubr.bf16.mxu0 0
      %512 = vmatmul.mubr.bf16.gmra.mrb[0].mxu0 %v414
      %v513 = vpop.f32.mrb[0].mxu0
      %v514 = vadd.f32 0.0, %v513
      %v515 = vpop.f32.mrb[0].mxu0
      %v516 = vpop.f32.mrb[0].mxu0
      %v517 = vpop.f32.mrb[0].mxu0
      %518 = vdwg.mxu0
      %v519 = vadd.f32 %v413, %v514
      %520 = vst [vmem:[#allocation2] sm:$0xff] %v519
      // Predicated region
      $region45: #{residual_add_ff.1} parent=39 // pred_check
        %p521 = pneg %p286
      $region46: #{residual_add_ff.1} parent=39 // pred_check_branch
        %523 = sbr.rel (%p521) target = $region48
      $region47: #{residual_add_ff.1} parent=39 // pred_region
        %v524 = vld [vmem:[#allocation2] sm:$0xff]
        %v525 = vld [vmem:[%s4] sm:$0x1]
        %v527 = vlaneseq
        %v528 = vshrl.u32 %v527, 7
        %v529 = vsub.s32 0, %v528
        %v530 = vrot.slane %v525, %v529
        %v532 = vadd.f32 %v524, %v530
        %v533 = vadd.f32 %v532, %v291
        %534 = vst [vmem:[%s284] sm:$0xff] %v533
      $region48: #{residual_add_ff.1} parent=39 // pred_fallthru
        _
      %p535 = scmp.lt.s32.totalorder %s20, 1
      %s536 = scalar_select %p535, %s20, 1
      %s537 = smul.addr %s536, 8
      %s538 = scalar_lea.vmem %s5, %s537
      // Predicated region
      $region49: #{residual_add_ff.1} parent=39 // pred_check
        %p539 = pneg %p171
      $region50: #{residual_add_ff.1} parent=39 // pred_check_branch
        %541 = sbr.rel (%p539) target = $region52
      $region51: #{residual_add_ff.1} parent=39 // pred_region
        _
      $region52: #{residual_add_ff.1} parent=39 // pred_fallthru
        _
    $region40: #{residual_add_ff.1} parent=5 // pred_fallthru
      _
    %p542 = scmp.le.s32.totalorder 2, %s11
    // Predicated region
    $region53: #{residual_add_ff.1} parent=5 // pred_check
      %p543 = pneg %p542
    $region54: #{residual_add_ff.1} parent=5 // pred_check_branch
      %545 = sbr.rel (%p543) target = $region56
    $region55: #{residual_add_ff.1} parent=5 // pred_region
      %s546 = ssub.s32 %s11, 2
      // Predicated region
      $region57: #{residual_add_ff.1} parent=55 // pred_check
        %p547 = pneg %p177
      $region58: #{residual_add_ff.1} parent=55 // pred_check_branch
        %549 = sbr.rel (%p547) target = $region60
      $region59: #{residual_add_ff.1} parent=55 // pred_region
        %p550 = scmp.lt.s32.totalorder %s22, 1
        %s551 = scalar_select %p550, %s22, 1
        %s552 = smul.addr %s551, 8
        %s553 = scalar_lea.vmem %s5, %s552
      $region60: #{residual_add_ff.1} parent=55 // pred_fallthru
        _
    $region56: #{residual_add_ff.1} parent=5 // pred_fallthru
      _
  $region6: #{residual_add_ff.1} parent=0 // loop_footer
    %s15 = sadd.s32 1, %s11
  $region7: #{residual_add_ff.1} parent=0 // loop_footer_branch
    %10 = sbr.rel target = $region3
  $region8: #{residual_add_ff.1} parent=0 // loop_exit
    _

</llo_original>
